<compile_context>
chip_gen: v6e
topology: v6e:2x2x1
jax: 0.10.0
libtpu: 0.0.40
codegen_flags: <defaults>
</compile_context>

<pallas_src>
import jax
import jax.numpy as jnp
from jax.experimental import pallas as pl
from jax.experimental.pallas import tpu as pltpu

KSIZE = 7
PAD = 3          # padding for kernel_size=7
LANE = 128       # TPU lane width


# --------------------------------------------------------------------------
# Weight-only preparation: dense conv-as-matmul operator (built once).
# --------------------------------------------------------------------------
def _conv7x7_operator(weight, H, W, hw_pad, dtype):
    """Dense (hw_pad, hw_pad) operator T with out_flat[q] = sum_p m[p] * T[p,q].

    Implements a 7x7 cross-correlation with zero padding=3 (PyTorch Conv2d
    semantics).  Rows/cols >= H*W are zero so the lane padding added in the
    wrapper is inert.
    """
    hw = H * W
    idx = jnp.arange(hw)
    ph, pw = idx // W, idx % W               # source pixel p
    dy = ph[:, None] - ph[None, :] + PAD     # kernel row tap index (p vs q)
    dx = pw[:, None] - pw[None, :] + PAD     # kernel col tap index
    valid = (dy >= 0) & (dy < KSIZE) & (dx >= 0) & (dx < KSIZE)
    taps = weight[jnp.clip(dy, 0, KSIZE - 1), jnp.clip(dx, 0, KSIZE - 1)]
    t = jnp.where(valid, taps, 0.0).astype(jnp.float32)
    t = jnp.pad(t, ((0, hw_pad - hw), (0, hw_pad - hw)))
    return t.astype(dtype)


# --------------------------------------------------------------------------
# Kernel
# --------------------------------------------------------------------------
def _spatial_attention_kernel(x_ref, t_ref, o_ref, mmax_ref):
    # x_ref:    (bn, bc, hw_pad)  input channel tile (lane axis = padded H*W)
    # t_ref:    (hw_pad, hw_pad)  conv-as-matmul Toeplitz operator
    # o_ref:    (bn, hw_pad)      output block (lane-dense store)
    # mmax_ref: (bn, hw_pad) f32  running channel max (VMEM scratch)
    c = pl.program_id(1)

    @pl.when(c == 0)
    def _():
        mmax_ref[...] = jnp.full(mmax_ref.shape, -jnp.inf, mmax_ref.dtype)

    # Streaming channel-max reduction: reduce in the input dtype (max is
    # exact), cast once afterwards -> no f32 copy of the whole block in vregs.
    blk_max = jnp.max(x_ref[...], axis=1).astype(jnp.float32)
    mmax_ref[...] = jnp.maximum(mmax_ref[...], blk_max)

    @pl.when(c == pl.num_programs(1) - 1)
    def _():
        # 7x7 conv (zero padding folded into T) as one MXU matmul with f32
        # accumulation; sigmoid on the EUP; lane-dense store.
        m = mmax_ref[...].astype(t_ref.dtype)
        y = jnp.dot(m, t_ref[...], preferred_element_type=jnp.float32)
        o_ref[...] = jax.nn.sigmoid(y).astype(o_ref.dtype)


# --------------------------------------------------------------------------
# Generation-aware tiling helpers
# --------------------------------------------------------------------------
def _min_sublane(dtype):
    # Minimum sublane tile: 8 for 4-byte, 16 for 2-byte, 32 for 1-byte dtypes.
    return max(8, 32 // jnp.dtype(dtype).itemsize)


def _vmem_limit_bytes():
    cap = 64 * 1024 * 1024  # conservative fallback (v7x-sized)
    try:
        info = pltpu.get_tpu_info()
        cap = int(getattr(info, "vmem_capacity_bytes", cap)) or cap
    except Exception:
        pass
    # ~3/4 of physical: ~96 MiB on v5e/v6e (128 MiB), ~48 MiB on v7x (64 MiB).
    return max(32 * 1024 * 1024, min((cap * 3) // 4, 100 * 1024 * 1024))


def _pick_bn(N):
    # Prefer >=2 batch grid steps so the "parallel" axis can shard across
    # TensorCores (v7x).  A split block must keep the output's sublane dim a
    # multiple of 8, so only 8-aligned divisors of N qualify.
    for bn in range(N // 2, 7, -1):
        if N % bn == 0 and bn % 8 == 0:
            return bn
    return N


def _pick_bc(C, bn, hw_pad, x_dtype, t_bytes, vmem_limit):
    min_sub = _min_sublane(x_dtype)
    itemsize = jnp.dtype(x_dtype).itemsize
    # Budget: double-buffered x tile must coexist with the (single-buffered)
    # operator, the f32 running-max scratch, the output block and slack.
    fixed = t_bytes + bn * hw_pad * 4 + 2 * bn * hw_pad * itemsize + (1 << 20)
    budget = max(vmem_limit - fixed, 1 << 20)
    bc_cap = max(budget // (2 * bn * hw_pad * itemsize), 1)
    legal = [bc for bc in range(1, C + 1)
             if C % bc == 0 and (bc == C or bc % min_sub == 0)]
    fitting = [bc for bc in legal if bc <= bc_cap]
    return max(fitting) if fitting else min(legal)


def _operator_spec(hw_pad):
    # The operator block is identical at every grid step: single-buffer it so
    # the saved VMEM goes into a fatter x channel tile.
    try:
        return pl.BlockSpec((hw_pad, hw_pad), lambda n, c: (0, 0),
                            pipeline_mode=pl.Buffered(buffer_count=1))
    except TypeError:   # pipeline_mode not available -> default double-buffer
        return pl.BlockSpec((hw_pad, hw_pad), lambda n, c: (0, 0))


# --------------------------------------------------------------------------
# Wrapper
# --------------------------------------------------------------------------
def spatial_attention(x, conv_weight, *, n_block=None, c_block=None,
                      operator_dtype=jnp.bfloat16):
    """x: (N, C, H, W), conv_weight: (7, 7) -> (N, 1, H, W) attention map."""
    N, C, H, W = x.shape
    hw = H * W
    hw_pad = ((hw + LANE - 1) // LANE) * LANE

    vmem_limit = _vmem_limit_bytes()
    t_bytes = hw_pad * hw_pad * jnp.dtype(operator_dtype).itemsize
    if t_bytes > vmem_limit // 2:
        raise ValueError(
            "dense conv operator too large for VMEM; use the banded "
            "per-kernel-row formulation for large feature maps")

    bn = _pick_bn(N) if n_block is None else min(n_block, N)
    if N % bn != 0:
        raise ValueError("n_block must evenly divide N")
    if bn != N and bn % 8 != 0:
        raise ValueError("a batch split requires n_block to be a multiple of 8")

    min_sub = _min_sublane(x.dtype)
    if c_block is None:
        bc = _pick_bc(C, bn, hw_pad, x.dtype, t_bytes, vmem_limit)
    else:
        bc = min(c_block, C)
    if C % bc != 0:
        raise ValueError("c_block must evenly divide C")
    if bc != C and bc % min_sub != 0:
        raise ValueError(f"c_block must be a multiple of {min_sub} for "
                         f"{jnp.dtype(x.dtype).name} inputs (or the full C)")

    # Layout plumbing only: flatten spatial dims onto the lane axis and pad to
    # a multiple of 128 lanes so all stores are unmasked full-lane vst.
    xf = x.reshape(N, C, hw)
    if hw_pad != hw:
        xf = jnp.pad(xf, ((0, 0), (0, 0), (0, hw_pad - hw)))
    t2 = _conv7x7_operator(conv_weight.astype(jnp.float32), H, W, hw_pad,
                           operator_dtype)

    out_flat = pl.pallas_call(
        _spatial_attention_kernel,
        out_shape=jax.ShapeDtypeStruct((N, hw_pad), x.dtype),
        grid=(N // bn, C // bc),
        in_specs=[
            pl.BlockSpec((bn, bc, hw_pad), lambda n, c: (n, c, 0)),
            _operator_spec(hw_pad),
        ],
        # Same output block across the channel axis -> resident accumulator,
        # written only on the final channel step.
        out_specs=pl.BlockSpec((bn, hw_pad), lambda n, c: (n, 0)),
        scratch_shapes=[pltpu.VMEM((bn, hw_pad), jnp.float32)],
        compiler_params=pltpu.CompilerParams(
            # Batch steps are independent -> "parallel" (2 TCs on v7x);
            # channel axis is a reduction -> "arbitrary" (kept last).
            dimension_semantics=("parallel", "arbitrary"),
            vmem_limit_bytes=vmem_limit,
        ),
    )(xf, t2)

    return out_flat[:, :hw].reshape(N, 1, H, W)


# --------------------------------------------------------------------------
# Demo / correctness check
# --------------------------------------------------------------------------
if __name__ == "__main__":
    key = jax.random.PRNGKey(0)
    kx, kw, kx2 = jax.random.split(key, 3)

    def reference(x, w):
        max_out = jnp.max(x, axis=1, keepdims=True)                 # (N,1,H,W)
        y = jax.lax.conv_general_dilated(
            max_out, w.reshape(1, 1, KSIZE, KSIZE),
            window_strides=(1, 1), padding=((PAD, PAD), (PAD, PAD)),
            dimension_numbers=("NCHW", "OIHW", "NCHW"),
            precision=jax.lax.Precision.HIGHEST)
        return jax.nn.sigmoid(y)

    # Deterministic Conv2d(1, 1, 7, bias=False) weight, stored as (7, 7).
    bound = 1.0 / (KSIZE * KSIZE) ** 0.5
    conv_w = jax.random.uniform(kw, (KSIZE, KSIZE), jnp.float32, -bound, bound)

    # Case 1: lane-aligned map (16x16 -> hw=256), default bf16 operator,
    # auto-selected tiles.
    N, C, H, W = 2, 16, 16, 16
    x = jax.random.normal(kx, (N, C, H, W), dtype=jnp.float32)
    out = spatial_attention(x, conv_w)
    jax.block_until_ready(out)
    assert out.shape == (N, 1, H, W)
    err = float(jnp.max(jnp.abs(out - reference(x, conv_w))))
    # bf16 operand + f32 MXU accumulation + sigmoid: loose-but-bug-catching.
    assert err < 2e-2, err

    # Case 2: non-lane-aligned map (10x10 -> hw=100, padded to 128), f32
    # operator, and c_block=8 to exercise the streaming channel-max reduction
    # across two "arbitrary" grid steps.
    N2, C2, H2, W2 = 2, 16, 10, 10
    x2 = jax.random.normal(kx2, (N2, C2, H2, W2), dtype=jnp.float32)
    out2 = spatial_attention(x2, conv_w, c_block=8,
                             operator_dtype=jnp.float32)
    jax.block_until_ready(out2)
    assert out2.shape == (N2, 1, H2, W2)
    err2 = float(jnp.max(jnp.abs(out2 - reference(x2, conv_w))))
    assert err2 < 1e-4, err2

    print("KERNEL_OK")
</pallas_src>

<mosaic_0001>
module attributes {stable_mosaic.version = 11 : i64} {
  func.func @_spatial_attention_kernel(%arg0: i32, %arg1: i32, %arg2: memref<2x16x256xf32, #tpu.memory_space<vmem>>, %arg3: memref<256x256xbf16, #tpu.memory_space<vmem>>, %arg4: memref<2x256xf32, #tpu.memory_space<vmem>>, %arg5: memref<2x256xf32, #tpu.memory_space<vmem>>) attributes {dimension_semantics = [#tpu.dimension_semantics<parallel>, #tpu.dimension_semantics<arbitrary>], iteration_bounds = array<i64: 1, 1>, scalar_prefetch = 0 : i64, scratch_operands = 1 : i64, tpu.core_type = #tpu.core_type<tc>, window_params = [{transform_indices = @transform_0, window_bounds = array<i64: 2, 16, 256>}, {pipeline_mode = #tpu.pipeline_mode<synchronous>, transform_indices = @transform_1, window_bounds = array<i64: 256, 256>}, {transform_indices = @transform_2, window_bounds = array<i64: 2, 256>}]} {
    %c0_i32 = arith.constant 0 : i32
    %0 = arith.cmpi eq, %arg1, %c0_i32 : i32
    %1 = arith.extui %0 : i1 to i32
    %c0_i32_0 = arith.constant 0 : i32
    %2 = arith.cmpi ne, %1, %c0_i32_0 : i32
    scf.if %2 {
      %cst_9 = arith.constant 0xFF800000 : f32
      %11 = vector.broadcast %cst_9 : f32 to vector<2x256xf32>
      %c0_10 = arith.constant 0 : index
      %c0_11 = arith.constant 0 : index
      %12 = vector.load %arg5[%c0_10, %c0_11] : memref<2x256xf32, #tpu.memory_space<vmem>>, vector<2x256xf32>
      tpu.vector_store %arg5[%c0_10, %c0_11], %11 {strides = array<i32>} : memref<2x256xf32, #tpu.memory_space<vmem>>, vector<2x256xf32>,
    } else {
    }
    %c0 = arith.constant 0 : index
    %c0_1 = arith.constant 0 : index
    %c0_2 = arith.constant 0 : index
    %3 = vector.load %arg2[%c0, %c0_1, %c0_2] : memref<2x16x256xf32, #tpu.memory_space<vmem>>, vector<2x16x256xf32>
    %cst = arith.constant dense<0xFF800000> : vector<2x256xf32>
    %4 = vector.multi_reduction <maximumf>, %3, %cst [1] : vector<2x16x256xf32> to vector<2x256xf32>
    %c0_3 = arith.constant 0 : index
    %c0_4 = arith.constant 0 : index
    %5 = vector.load %arg5[%c0_3, %c0_4] : memref<2x256xf32, #tpu.memory_space<vmem>>, vector<2x256xf32>
    %6 = arith.maximumf %5, %4 : vector<2x256xf32>
    %c0_5 = arith.constant 0 : index
    %c0_6 = arith.constant 0 : index
    %7 = vector.load %arg5[%c0_5, %c0_6] : memref<2x256xf32, #tpu.memory_space<vmem>>, vector<2x256xf32>
    tpu.vector_store %arg5[%c0_5, %c0_6], %6 {strides = array<i32>} : memref<2x256xf32, #tpu.memory_space<vmem>>, vector<2x256xf32>,
    %c0_i32_7 = arith.constant 0 : i32
    %8 = arith.cmpi eq, %arg1, %c0_i32_7 : i32
    %9 = arith.extui %8 : i1 to i32
    %c0_i32_8 = arith.constant 0 : i32
    %10 = arith.cmpi ne, %9, %c0_i32_8 : i32
    scf.if %10 {
      %c0_9 = arith.constant 0 : index
      %c0_10 = arith.constant 0 : index
      %11 = vector.load %arg5[%c0_9, %c0_10] : memref<2x256xf32, #tpu.memory_space<vmem>>, vector<2x256xf32>
      %12 = arith.truncf %11 : vector<2x256xf32> to vector<2x256xbf16>
      %c0_11 = arith.constant 0 : index
      %c0_12 = arith.constant 0 : index
      %13 = vector.load %arg3[%c0_11, %c0_12] : memref<256x256xbf16, #tpu.memory_space<vmem>>, vector<256x256xbf16>
      %cst_13 = arith.constant dense<0.000000e+00> : vector<2x256xf32>
      %14 = tpu.matmul %12, %13, %cst_13 {dimension_numbers = #tpu.dot_dimension_numbers<[1], [0], [0], [1], [0, 0, 1, 1], [], []>} : vector<2x256xbf16>, vector<256x256xbf16>, vector<2x256xf32> -> vector<2x256xf32>
      %15 = arith.negf %14 : vector<2x256xf32>
      %16 = math.exp %15 : vector<2x256xf32>
      %cst_14 = arith.constant 1.000000e+00 : f32
      %17 = vector.broadcast %cst_14 : f32 to vector<2x256xf32>
      %18 = arith.addf %17, %16 : vector<2x256xf32>
      %19 = arith.divf %17, %18 : vector<2x256xf32>
      %c0_15 = arith.constant 0 : index
      %c0_16 = arith.constant 0 : index
      %20 = vector.load %arg4[%c0_15, %c0_16] : memref<2x256xf32, #tpu.memory_space<vmem>>, vector<2x256xf32>
      tpu.vector_store %arg4[%c0_15, %c0_16], %19 {strides = array<i32>} : memref<2x256xf32, #tpu.memory_space<vmem>>, vector<2x256xf32>,
    } else {
    }
    return
  }
  func.func @transform_0(%arg0: i32, %arg1: i32) -> (i32, i32, i32) {
    %c0_i32 = arith.constant 0 : i32
    %c0_i32_0 = arith.constant 0 : i32
    return %arg0, %arg1, %c0_i32 : i32, i32, i32
  }
  func.func @transform_1(%arg0: i32, %arg1: i32) -> (i32, i32) {
    %c0_i32 = arith.constant 0 : i32
    %c0_i32_0 = arith.constant 0 : i32
    %c0_i32_1 = arith.constant 0 : i32
    return %c0_i32, %c0_i32_0 : i32, i32
  }
  func.func @transform_2(%arg0: i32, %arg1: i32) -> (i32, i32) {
    %c0_i32 = arith.constant 0 : i32
    %c0_i32_0 = arith.constant 0 : i32
    return %arg0, %c0_i32 : i32, i32
  }
}

</mosaic_0001>

<llo_original>
// kernel: tpu_custom_call.1
$region0: #{tpu_custom_call.1}
  #allocation0 [shape = 'u32[]', space=smem, size = 0x4, offset = 0x4, fixed_abs, tag = 'smem constant byte address 0x4 - core index']
  #allocation1 [shape = 'u32[144,128]{1,0:T(1,128)}', space=vmem, size = 0x12000, scoped, tag = 'internal scratch']
  #allocation2 [shape = 'f32[2,256]{1,0:T(2,128)}', space=vmem, size = 0x800, scoped, tag = 'scratch operand']
  %s0 = inlined_call_operand.hbm [shape: f32[2,16,256], index: 0, kind: input, shape index: {}]
  %s1 = inlined_call_operand.hbm [shape: bf16[256,256], index: 1, kind: input, shape index: {}]
  %s2 = inlined_call_operand.hbm [shape: f32[2,256], index: 2, kind: output, shape index: {}]
  %s3 = sld [smem:[#allocation0]]
  $region34: #{tpu_custom_call.1} parent=0
    _
  %s5 = ssub.s32 1, %s3
  %s6 = scalar_select 0, %s5, %s3
  $region1: #{tpu_custom_call.1} parent=0
    #allocation3 [shape = 'u8[32768]{0}', space=vmem, size = 0x8000, scoped, tag = 'input window, operand 0, single buffered']
    #allocation4 [shape = 's32[1]{0}', space=sflag, size = 0x4, scoped, tag = 'scoped memory for tpu_custom_call.1']
    #allocation5 [shape = 's32[1]{0}', space=sflag, size = 0x4, scoped, tag = 'scoped memory for tpu_custom_call.1']
    #allocation6 [shape = 'u8[131072]{0}', space=vmem, size = 0x20000, scoped, tag = 'input window, operand 1, single buffered']
    #allocation7 [shape = 's32[1]{0}', space=sflag, size = 0x4, scoped, tag = 'scoped memory for tpu_custom_call.1']
    #allocation8 [shape = 'u8[2048]{0}', space=vmem, size = 0x800, scoped, tag = 'output window, operand 0, single buffered']
    %7 = vsyncpa [#allocation4], 0
    %8 = vsyncpa [#allocation7], 0
    %9 = vsyncpa [#allocation5], 0
    // Predicated region
    $region2: #{tpu_custom_call.1} parent=1 // pred_check
      _
    $region3: #{tpu_custom_call.1} parent=1 // pred_check_branch
      %11 = sbr.rel (0) target = $region5
    $region4: #{tpu_custom_call.1} parent=1 // pred_region
      %s13 = ssub.s32 1024, 1024
      %14 = vsyncadd [#allocation4], %s13
      %s15 = sshll.u32 [#allocation3], 4
      %s16 = int_to_ptr.vmem [resolvable:$true] %s15
      %21 = dma.hbm_to_vmem [thread:$0]  %s0, 1024, %s16, [#allocation4], 256, 256, 16
    $region5: #{tpu_custom_call.1} parent=1 // pred_fallthru
      _
    // Predicated region
    $region6: #{tpu_custom_call.1} parent=1 // pred_check
      _
    $region7: #{tpu_custom_call.1} parent=1 // pred_check_branch
      %23 = sbr.rel (0) target = $region9
    $region8: #{tpu_custom_call.1} parent=1 // pred_region
      %s25 = ssub.s32 4096, 4096
      %26 = vsyncadd [#allocation7], %s25
      %s27 = sshll.u32 [#allocation6], 4
      %s28 = int_to_ptr.vmem [resolvable:$true] %s27
      %33 = dma.hbm_to_vmem [thread:$0]  %s1, 4096, %s28, [#allocation7], 128, 128, 8
    $region9: #{tpu_custom_call.1} parent=1 // pred_fallthru
      _
    // Predicated region
    $region10: #{tpu_custom_call.1} parent=1 // pred_check
      _
    $region11: #{tpu_custom_call.1} parent=1 // pred_check_branch
      %35 = sbr.rel (0) target = $region13
    $region12: #{tpu_custom_call.1} parent=1 // pred_region
      %36 = dma.done [#allocation4], 1024
    $region13: #{tpu_custom_call.1} parent=1 // pred_fallthru
      _
    // Predicated region
    $region14: #{tpu_custom_call.1} parent=1 // pred_check
      _
    $region15: #{tpu_custom_call.1} parent=1 // pred_check_branch
      %38 = sbr.rel (0) target = $region17
    $region16: #{tpu_custom_call.1} parent=1 // pred_region
      %39 = dma.done [#allocation7], 4096
    $region17: #{tpu_custom_call.1} parent=1 // pred_fallthru
      _
    %p40 = scmp.eq.s32.totalorder 0, 0
    // Predicated region
    $region18: #{tpu_custom_call.1} parent=1 // pred_check
      %p41 = pneg %p40
    $region19: #{tpu_custom_call.1} parent=1 // pred_check_branch
      %43 = sbr.rel (%p41) target = $region21
    $region20: #{tpu_custom_call.1} parent=1 // pred_region
      %44 = vst [vmem:[#allocation2] sm:$0xf] -inf
    $region21: #{tpu_custom_call.1} parent=1 // pred_fallthru
      _
    %v45 = vld [vmem:[#allocation3] sm:$0xff]
    %v46 = vld [vmem:[#allocation3 + $0x8] sm:$0xff]
    %v47 = vld [vmem:[#allocation3 + $0x10] sm:$0xff]
    %v48 = vld [vmem:[#allocation3 + $0x18] sm:$0xff]
    %v49 = vld [vmem:[#allocation3 + $0x20] sm:$0xff]
    %v50 = vld [vmem:[#allocation3 + $0x28] sm:$0xff]
    %v51 = vld [vmem:[#allocation3 + $0x30] sm:$0xff]
    %v52 = vld [vmem:[#allocation3 + $0x38] sm:$0xff]
    %v53 = vmax.f32 %v45, %v47
    %v54 = vrot.slane %v53, 4
    %v55 = vmax.f32 %v53, %v54
    %v56 = vrot.slane %v55, 2
    %v57 = vmax.f32 %v55, %v56
    %v58 = vrot.slane %v57, 1
    %v59 = vmax.f32 %v57, %v58
    %v60 = vmax.f32 %v46, %v48
    %v61 = vrot.slane %v60, 4
    %v62 = vmax.f32 %v60, %v61
    %v63 = vrot.slane %v62, 2
    %v64 = vmax.f32 %v62, %v63
    %v65 = vrot.slane %v64, 1
    %v66 = vmax.f32 %v64, %v65
    %v67 = vmax.f32 %v49, %v51
    %v68 = vrot.slane %v67, 4
    %v69 = vmax.f32 %v67, %v68
    %v70 = vrot.slane %v69, 2
    %v71 = vmax.f32 %v69, %v70
    %v72 = vrot.slane %v71, 1
    %v73 = vmax.f32 %v71, %v72
    %v74 = vmax.f32 %v50, %v52
    %v75 = vrot.slane %v74, 4
    %v76 = vmax.f32 %v74, %v75
    %v77 = vrot.slane %v76, 2
    %v78 = vmax.f32 %v76, %v77
    %v79 = vrot.slane %v78, 1
    %v80 = vmax.f32 %v78, %v79
    %v81 = vld [vmem:[#allocation2] sm:$0xf]
    %v86 = vcombine.low %v59, %v66
    %v88 = vunpack.c.l.s4 1983009808
    %v89 = vunpack.c.0.s8 %v88
    %v90 = vlaneseq
    %v91 = vshrl.u32 %v90, 7
    %v92 = vsub.s32 %v89, %v91
    %v93 = vrot.slane %v86, %v92
    %v94 = vcombine.low %v73, %v80
    %v96 = vunpack.c.l.s4 1983009808
    %v97 = vunpack.c.0.s8 %v96
    %v98 = vlaneseq
    %v99 = vshrl.u32 %v98, 7
    %v100 = vsub.s32 %v97, %v99
    %v101 = vrot.slane %v94, %v100
    %vm102 = vcmask 1044484
    %v103 = vsel %vm102, %v93, %v93
    %vm104 = vcmask 1046534
    %v105 = vsel %vm104, %v93, %v103
    %v106 = vrot.slane %v101, 7
    %vm107 = vcmask 1041409
    %v108 = vsel %vm107, %v106, %v105
    %vm109 = vcmask 1043459
    %v110 = vsel %vm109, %v106, %v108
    %vm111 = vcmask 1045509
    %v112 = vsel %vm111, %v106, %v110
    %vm113 = vcmask 1047559
    %v114 = vsel %vm113, %v106, %v112
    %v116 = vmax.f32 %v81, %v114
    %117 = vst [vmem:[#allocation2] sm:$0xf] %v116
    // Predicated region
    $region22: #{tpu_custom_call.1} parent=1 // pred_check
      %p118 = pneg %p40
    $region23: #{tpu_custom_call.1} parent=1 // pred_check_branch
      %120 = sbr.rel (%p118) target = $region25
    $region24: #{tpu_custom_call.1} parent=1 // pred_region
      %v121 = vld [vmem:[#allocation2] sm:$0xf]
      %v124 = vunpack.c.l.s4 1983009808
      %v125 = vunpack.c.0.s8 %v124
      %v126 = vlaneseq
      %v127 = vshrl.u32 %v126, 7
      %v128 = vsub.s32 %v125, %v127
      %v129 = vrot.slane %v121, %v128
      %v130 = vcombine.high %v129, %v129
      %v133 = vpack.c.bf16 %v129, %v129
      %v134 = vpack.c.bf16 %v130, %v130
      %v135 = vld [vmem:[#allocation6] sm:$0xff]
      %v136 = vld [vmem:[#allocation6 + $0x8] sm:$0xff]
      %v137 = vld [vmem:[#allocation6 + $0x10] sm:$0xff]
      %v138 = vld [vmem:[#allocation6 + $0x18] sm:$0xff]
      %v139 = vld [vmem:[#allocation6 + $0x20] sm:$0xff]
      %v140 = vld [vmem:[#allocation6 + $0x28] sm:$0xff]
      %v141 = vld [vmem:[#allocation6 + $0x30] sm:$0xff]
      %v142 = vld [vmem:[#allocation6 + $0x38] sm:$0xff]
      %v143 = vld [vmem:[#allocation6 + $0x40] sm:$0xff]
      %v144 = vld [vmem:[#allocation6 + $0x48] sm:$0xff]
      %v145 = vld [vmem:[#allocation6 + $0x50] sm:$0xff]
      %v146 = vld [vmem:[#allocation6 + $0x58] sm:$0xff]
      %v147 = vld [vmem:[#allocation6 + $0x60] sm:$0xff]
      %v148 = vld [vmem:[#allocation6 + $0x68] sm:$0xff]
      %v149 = vld [vmem:[#allocation6 + $0x70] sm:$0xff]
      %v150 = vld [vmem:[#allocation6 + $0x78] sm:$0xff]
      %v151 = vld [vmem:[#allocation6 + $0x80] sm:$0xff]
      %v152 = vld [vmem:[#allocation6 + $0x88] sm:$0xff]
      %v153 = vld [vmem:[#allocation6 + $0x90] sm:$0xff]
      %v154 = vld [vmem:[#allocation6 + $0x98] sm:$0xff]
      %v155 = vld [vmem:[#allocation6 + $0xa0] sm:$0xff]
      %v156 = vld [vmem:[#allocation6 + $0xa8] sm:$0xff]
      %v157 = vld [vmem:[#allocation6 + $0xb0] sm:$0xff]
      %v158 = vld [vmem:[#allocation6 + $0xb8] sm:$0xff]
      %v159 = vld [vmem:[#allocation6 + $0xc0] sm:$0xff]
      %v160 = vld [vmem:[#allocation6 + $0xc8] sm:$0xff]
      %v161 = vld [vmem:[#allocation6 + $0xd0] sm:$0xff]
      %v162 = vld [vmem:[#allocation6 + $0xd8] sm:$0xff]
      %v163 = vld [vmem:[#allocation6 + $0xe0] sm:$0xff]
      %v164 = vld [vmem:[#allocation6 + $0xe8] sm:$0xff]
      %v165 = vld [vmem:[#allocation6 + $0xf0] sm:$0xff]
      %v166 = vld [vmem:[#allocation6 + $0xf8] sm:$0xff]
      %v199 = vunpack.c.l.b16 %v135
      %v200 = vunpack.c.h.b16 %v135
      %v201 = vunpack.c.l.b16 %v136
      %v202 = vunpack.c.h.b16 %v136
      %v203 = vunpack.c.l.b16 %v137
      %v204 = vunpack.c.h.b16 %v137
      %v205 = vunpack.c.l.b16 %v138
      %v206 = vunpack.c.h.b16 %v138
      %v207 = vunpack.c.l.b16 %v139
      %v208 = vunpack.c.h.b16 %v139
      %v209 = vunpack.c.l.b16 %v140
      %v210 = vunpack.c.h.b16 %v140
      %v211 = vunpack.c.l.b16 %v141
      %v212 = vunpack.c.h.b16 %v141
      %v213 = vunpack.c.l.b16 %v142
      %v214 = vunpack.c.h.b16 %v142
      %v215 = vunpack.c.l.b16 %v143
      %v216 = vunpack.c.h.b16 %v143
      %v217 = vunpack.c.l.b16 %v144
      %v218 = vunpack.c.h.b16 %v144
      %v219 = vunpack.c.l.b16 %v145
      %v220 = vunpack.c.h.b16 %v145
      %v221 = vunpack.c.l.b16 %v146
      %v222 = vunpack.c.h.b16 %v146
      %v223 = vunpack.c.l.b16 %v147
      %v224 = vunpack.c.h.b16 %v147
      %v225 = vunpack.c.l.b16 %v148
      %v226 = vunpack.c.h.b16 %v148
      %v227 = vunpack.c.l.b16 %v149
      %v228 = vunpack.c.h.b16 %v149
      %v229 = vunpack.c.l.b16 %v150
      %v230 = vunpack.c.h.b16 %v150
      %v231 = vunpack.c.l.b16 %v151
      %v232 = vunpack.c.h.b16 %v151
      %v233 = vunpack.c.l.b16 %v152
      %v234 = vunpack.c.h.b16 %v152
      %v235 = vunpack.c.l.b16 %v153
      %v236 = vunpack.c.h.b16 %v153
      %v237 = vunpack.c.l.b16 %v154
      %v238 = vunpack.c.h.b16 %v154
      %v239 = vunpack.c.l.b16 %v155
      %v240 = vunpack.c.h.b16 %v155
      %v241 = vunpack.c.l.b16 %v156
      %v242 = vunpack.c.h.b16 %v156
      %v243 = vunpack.c.l.b16 %v157
      %v244 = vunpack.c.h.b16 %v157
      %v245 = vunpack.c.l.b16 %v158
      %v246 = vunpack.c.h.b16 %v158
      %v247 = vunpack.c.l.b16 %v159
      %v248 = vunpack.c.h.b16 %v159
      %v249 = vunpack.c.l.b16 %v160
      %v250 = vunpack.c.h.b16 %v160
      %v251 = vunpack.c.l.b16 %v161
      %v252 = vunpack.c.h.b16 %v161
      %v253 = vunpack.c.l.b16 %v162
      %v254 = vunpack.c.h.b16 %v162
      %v255 = vunpack.c.l.b16 %v163
      %v256 = vunpack.c.h.b16 %v163
      %v257 = vunpack.c.l.b16 %v164
      %v258 = vunpack.c.h.b16 %v164
      %v259 = vunpack.c.l.b16 %v165
      %v260 = vunpack.c.h.b16 %v165
      %v261 = vunpack.c.l.b16 %v166
      %v262 = vunpack.c.h.b16 %v166
      %v263 = vpack.c.b16 %v201, %v199
      %v264 = vpack.c.b16 %v202, %v200
      %v265 = vpack.c.b16 %v205, %v203
      %v266 = vpack.c.b16 %v206, %v204
      %v267 = vpack.c.b16 %v209, %v207
      %v268 = vpack.c.b16 %v210, %v208
      %v269 = vpack.c.b16 %v213, %v211
      %v270 = vpack.c.b16 %v214, %v212
      %v271 = vpack.c.b16 %v217, %v215
      %v272 = vpack.c.b16 %v218, %v216
      %v273 = vpack.c.b16 %v221, %v219
      %v274 = vpack.c.b16 %v222, %v220
      %v275 = vpack.c.b16 %v225, %v223
      %v276 = vpack.c.b16 %v226, %v224
      %v277 = vpack.c.b16 %v229, %v227
      %v278 = vpack.c.b16 %v230, %v228
      %v279 = vpack.c.b16 %v233, %v231
      %v280 = vpack.c.b16 %v234, %v232
      %v281 = vpack.c.b16 %v237, %v235
      %v282 = vpack.c.b16 %v238, %v236
      %v283 = vpack.c.b16 %v241, %v239
      %v284 = vpack.c.b16 %v242, %v240
      %v285 = vpack.c.b16 %v245, %v243
      %v286 = vpack.c.b16 %v246, %v244
      %v287 = vpack.c.b16 %v249, %v247
      %v288 = vpack.c.b16 %v250, %v248
      %v289 = vpack.c.b16 %v253, %v251
      %v290 = vpack.c.b16 %v254, %v252
      %v291 = vpack.c.b16 %v257, %v255
      %v292 = vpack.c.b16 %v258, %v256
      %v293 = vpack.c.b16 %v261, %v259
      %v294 = vpack.c.b16 %v262, %v260
      %327 = vmatprep.subr.bf16.mxu0 %v278
      %328 = vmatpush1.bf16.msra.mxu0 %v277
      %329 = vmatprep.subr.bf16.mxu0 %v276
      %330 = vmatpush1.bf16.msra.mxu0 %v275
      %331 = vmatprep.subr.bf16.mxu0 %v274
      %332 = vmatpush1.bf16.msra.mxu0 %v273
      %333 = vmatprep.subr.bf16.mxu0 %v272
      %334 = vmatpush1.bf16.msra.mxu0 %v271
      %335 = vmatprep.subr.bf16.mxu0 %v270
      %336 = vmatpush1.bf16.msra.mxu0 %v269
      %337 = vmatprep.subr.bf16.mxu0 %v268
      %338 = vmatpush1.bf16.msra.mxu0 %v267
      %339 = vmatprep.subr.bf16.mxu0 %v266
      %340 = vmatpush1.bf16.msra.mxu0 %v265
      %341 = vmatprep.subr.bf16.mxu0 %v264
      %342 = vmatpush1.bf16.msra.mxu0 %v263
      %343 = vmatprep.subr.bf16.mxu0 %v294
      %344 = vmatpush2.bf16.msra.mxu0 %v293
      %345 = vmatprep.subr.bf16.mxu0 %v292
      %346 = vmatpush2.bf16.msra.mxu0 %v291
      %347 = vmatprep.subr.bf16.mxu0 %v290
      %348 = vmatpush2.bf16.msra.mxu0 %v289
      %349 = vmatprep.subr.bf16.mxu0 %v288
      %350 = vmatpush2.bf16.msra.mxu0 %v287
      %351 = vmatprep.subr.bf16.mxu0 %v286
      %352 = vmatpush2.bf16.msra.mxu0 %v285
      %353 = vmatprep.subr.bf16.mxu0 %v284
      %354 = vmatpush2.bf16.msra.mxu0 %v283
      %355 = vmatprep.subr.bf16.mxu0 %v282
      %356 = vmatpush2.bf16.msra.mxu0 %v281
      %357 = vmatprep.subr.bf16.mxu0 %v280
      %358 = vmatpush2.bf16.msra.mxu0 %v279
      %359 = vmatprep.mubr.bf16.mxu0 %v134
      %360 = vmatmul.mubr.bf16.gmra.mxu0 %v133
      %v361 = vpop.f32.mrf.mxu0
      %v362 = vadd.f32 0.0, %v361
      %v363 = vpop.f32.mrf.mxu0
      %v364 = vadd.f32 0.0, %v363
      %v365 = vpop.f32.mrf.mxu0
      %v366 = vpop.f32.mrf.mxu0
      %367 = vdwg.mxu0
      %v368 = vxor.u32 %v362, 2147483648
      %v369 = vxor.u32 %v364, 2147483648
      %v370 = vmul.f32 %v368, 1.442695
      %v371 = vpow.pop %v370
      %v372 = vmul.f32 %v369, 1.442695
      %v373 = vpow.pop %v372
      %v374 = vadd.f32 %v371, 1.0
      %v375 = vadd.f32 %v373, 1.0
      %v376 = vrcp.pop %v374
      %v377 = vmul.f32 1.0, %v376
      %v378 = vrcp.pop %v375
      %v379 = vmul.f32 1.0, %v378
      %v382 = vcombine.low %v377, %v379
      %v384 = vunpack.c.l.s4 1983009808
      %v385 = vunpack.c.0.s8 %v384
      %v386 = vlaneseq
      %v387 = vshrl.u32 %v386, 7
      %v388 = vsub.s32 %v385, %v387
      %v389 = vrot.slane %v382, %v388
      %391 = vst [vmem:[#allocation8] sm:$0xf] %v389
    $region25: #{tpu_custom_call.1} parent=1 // pred_fallthru
      _
    // Predicated region
    $region26: #{tpu_custom_call.1} parent=1 // pred_check
      _
    $region27: #{tpu_custom_call.1} parent=1 // pred_check_branch
      %393 = sbr.rel (0) target = $region29
    $region28: #{tpu_custom_call.1} parent=1 // pred_region
      %s395 = ssub.s32 64, 64
      %396 = vsyncadd [#allocation5], %s395
      %s398 = sshll.u32 [#allocation8], 4
      %s399 = int_to_ptr.vmem [resolvable:$true] %s398
      %401 = dma.vmem_to_hbm [thread:$0]  %s399, 64, %s2, [#allocation5]
    $region29: #{tpu_custom_call.1} parent=1 // pred_fallthru
      _
    // Predicated region
    $region30: #{tpu_custom_call.1} parent=1 // pred_check
      _
    $region31: #{tpu_custom_call.1} parent=1 // pred_check_branch
      %403 = sbr.rel (0) target = $region33
    $region32: #{tpu_custom_call.1} parent=1 // pred_region
      %404 = dma.done [#allocation5], 64
    $region33: #{tpu_custom_call.1} parent=1 // pred_fallthru
      _
    %405 = vsyncpa [#allocation4], 1
    %406 = vsyncpa [#allocation7], 1
    %407 = vsyncpa [#allocation5], 1

</llo_original>
